<compile_context>
chip_gen: v7x
topology: tpu7x:2x2x1
jax: 0.10.0
libtpu: 0.0.40
codegen_flags: <defaults>
</compile_context>

<pallas_src>
import functools

import jax
import jax.numpy as jnp
import numpy as np
from jax.experimental import pallas as pl
from jax.experimental.pallas import tpu as pltpu


def _round_up(x, m):
    return ((x + m - 1) // m) * m


def amsoftmax_kernel(h_ref, w_ref, lab_ref, out_ref,
                     m_ref, l_ref, t_ref, hrn_ref, *,
                     scale, margin, num_classes, block_c, mask_tail):
    j = pl.program_id(1)
    nc = pl.num_programs(1)

    # --- per-batch-tile init (hoisted across class tiles) -------------------
    @pl.when(j == 0)
    def _init():
        hf = h_ref[...].astype(jnp.float32)                    # [TB, D]
        ssq = jnp.sum(hf * hf, axis=1, keepdims=True)          # [TB, 1]
        # scale * 1/||h_row||  (rsqrt -> EUP slot; clamp squared norm)
        hrn_ref[...] = scale * jax.lax.rsqrt(jnp.maximum(ssq, 1e-24))
        m_ref[...] = jnp.full_like(m_ref, -1e30)
        l_ref[...] = jnp.zeros_like(l_ref)
        t_ref[...] = jnp.zeros_like(t_ref)

    # --- MXU matmul: raw hidden tile x column-normalized weight tile --------
    raw = jnp.dot(h_ref[...], w_ref[...],
                  preferred_element_type=jnp.float32)          # [TB, TC] f32
    cos_s = raw * hrn_ref[...]                                 # scale * cos

    tb, tc = cos_s.shape
    lane = jax.lax.broadcasted_iota(jnp.int32, (tb, tc), 1)    # local class id
    local_label = lab_ref[...] - j * block_c                   # [TB, 1] int32
    onehot = lane == local_label                               # [TB, TC] bool

    # logits = scale * where(onehot, cos - margin, cos)   (single select)
    logits = jnp.where(onehot, cos_s - scale * margin, cos_s)
    if mask_tail:
        # Only the ragged last class tile has padded columns; for earlier
        # tiles the scalar limit >= tc so the mask is a no-op.
        logits = jnp.where(lane < (num_classes - j * block_c), logits, -1e30)

    # --- online logsumexp over class tiles -----------------------------------
    m_prev = m_ref[...]
    m_new = jnp.maximum(m_prev, jnp.max(logits, axis=1, keepdims=True))
    l_ref[...] = (l_ref[...] * jnp.exp(m_prev - m_new)
                  + jnp.sum(jnp.exp(logits - m_new), axis=1, keepdims=True))
    m_ref[...] = m_new
    t_ref[...] += jnp.sum(jnp.where(onehot, logits, 0.0), axis=1, keepdims=True)

    # --- finalize: per-row cross-entropy = logsumexp - target logit ----------
    @pl.when(j == nc - 1)
    def _finalize():
        out_ref[...] = m_ref[...] + jnp.log(l_ref[...]) - t_ref[...]


def amsoftmax_loss(hidden_states, labels, weight, *, scale=30.0, margin=0.4,
                   block_b=None, block_c=None):
    B, D = hidden_states.shape
    D2, C = weight.shape
    assert D == D2

    # --- tile selection ------------------------------------------------------
    if block_b is None:
        if B <= 256:
            block_b = _round_up(B, 8)          # single sublane-aligned tile
        else:
            # >= 2 batch tiles (both v7x TensorCores get work) and an
            # MXU-aligned (256) M dimension; cap at 512 for VMEM headroom.
            block_b = min(512, _round_up(-(-B // 2), 256))
    if block_c is None:
        block_c = None
        for cand in (1024, 512, 256, 128):     # prefer a divisor of C: no pad
            if C % cand == 0:
                block_c = cand
                break
        if block_c is None:
            block_c = min(_round_up(C, 128), 1024)

    b_pad = _round_up(B, block_b)
    c_pad = _round_up(C, block_c)
    nb = b_pad // block_b
    nc = c_pad // block_c

    hp = hidden_states if b_pad == B else jnp.pad(
        hidden_states, ((0, b_pad - B), (0, 0)))
    lp = jnp.pad(labels.reshape(-1).astype(jnp.int32),
                 (0, b_pad - B)).reshape(b_pad, 1)

    # Column-normalize W once in the wrapper (O(D*C), amortized over nb batch
    # tiles) so the kernel's inner loop has no per-tile [TB,TC]*wrn multiply
    # or (1, TC) side stream.
    wf = weight.astype(jnp.float32)
    wsq = jnp.sum(wf * wf, axis=0, keepdims=True)
    wn = (wf * jax.lax.rsqrt(jnp.maximum(wsq, 1e-24))).astype(weight.dtype)
    wp = wn if c_pad == C else jnp.pad(wn, ((0, 0), (0, c_pad - C)))

    kernel = functools.partial(
        amsoftmax_kernel, scale=float(scale), margin=float(margin),
        num_classes=C, block_c=block_c, mask_tail=(c_pad != C))

    # Conservative scoped-VMEM estimate (double-buffered inputs + f32 temps),
    # capped by the physical VMEM of the current generation with headroom
    # (v7x has only 64 MiB per TensorCore).
    h_isz = np.dtype(hp.dtype).itemsize
    w_isz = np.dtype(wp.dtype).itemsize
    est = (2 * block_b * D * h_isz          # hidden tiles (double-buffered)
           + 2 * D * block_c * w_isz        # weight tiles (double-buffered)
           + 2 * block_b * 4                # labels
           + 2 * block_b * 4                # output
           + 4 * block_b * 4                # scratch m/l/t/hrn
           + 8 * block_b * block_c * 4)     # live elementwise f32 temporaries
    try:
        vmem_cap = int(pltpu.get_tpu_info().vmem_capacity_bytes)
    except Exception:
        vmem_cap = 64 * 1024 * 1024
    cap_budget = int(vmem_cap * 0.625)       # 40 MiB on v7x, 80 MiB on v5e/v6e
    vmem_limit = int(min(cap_budget, max(32 * 1024 * 1024, 2 * est)))

    row_losses = pl.pallas_call(
        kernel,
        out_shape=jax.ShapeDtypeStruct((b_pad, 1), jnp.float32),
        grid_spec=pltpu.PrefetchScalarGridSpec(
            num_scalar_prefetch=0,
            grid=(nb, nc),
            in_specs=[
                pl.BlockSpec((block_b, D), lambda i, j: (i, 0)),   # hidden
                pl.BlockSpec((D, block_c), lambda i, j: (0, j)),   # norm. W
                pl.BlockSpec((block_b, 1), lambda i, j: (i, 0)),   # labels
            ],
            out_specs=pl.BlockSpec((block_b, 1), lambda i, j: (i, 0)),
            scratch_shapes=[
                pltpu.VMEM((block_b, 1), jnp.float32),   # running max m
                pltpu.VMEM((block_b, 1), jnp.float32),   # running sum l
                pltpu.VMEM((block_b, 1), jnp.float32),   # target logit t
                pltpu.VMEM((block_b, 1), jnp.float32),   # scale/||h_row||
            ]),
        compiler_params=pltpu.CompilerParams(
            dimension_semantics=("parallel", "arbitrary"),
            vmem_limit_bytes=vmem_limit),
    )(hp, wp, lp)

    # Tiny XLA reduction: mean over the real (unpadded) batch rows.
    return jnp.sum(row_losses[:B, 0]) / B


def amsoftmax_loss_ref(hidden_states, labels, weight, *, scale=30.0, margin=0.4):
    """Pure-JAX reference mirroring the PyTorch module."""
    w_n = weight / jnp.maximum(
        jnp.linalg.norm(weight, axis=0, keepdims=True), 1e-12)
    h_n = hidden_states / jnp.maximum(
        jnp.linalg.norm(hidden_states, axis=1, keepdims=True), 1e-12)
    cos = h_n @ w_n
    psi = cos - margin
    onehot = jax.nn.one_hot(labels, weight.shape[1], dtype=jnp.bool_)
    logits = scale * jnp.where(onehot, psi, cos)
    logp = jax.nn.log_softmax(logits, axis=-1)
    return -jnp.mean(jnp.take_along_axis(logp, labels[:, None], axis=1))


if __name__ == "__main__":
    key = jax.random.PRNGKey(0)

    # Test 1: small shape consistent with the module (B=8, D=32, C=16).
    B, D, C = 8, 32, 16
    k_h, k_w, k_l, key = jax.random.split(key, 4)
    hidden = jax.random.normal(k_h, (B, D), dtype=jnp.float32)
    weight = jax.random.normal(k_w, (D, C), dtype=jnp.float32)
    labels = jax.random.randint(k_l, (B,), 0, C, dtype=jnp.int32)

    loss = amsoftmax_loss(hidden, labels, weight, scale=30.0, margin=0.4)
    jax.block_until_ready(loss)
    loss_ref = amsoftmax_loss_ref(hidden, labels, weight, scale=30.0, margin=0.4)
    np.testing.assert_allclose(np.asarray(loss), np.asarray(loss_ref),
                               rtol=1e-4, atol=1e-4)

    # Test 2: multi-tile grid + batch/class padding + ragged-tail mask path.
    B2, D2, C2 = 24, 32, 200
    k_h, k_w, k_l, key = jax.random.split(key, 4)
    hidden2 = jax.random.normal(k_h, (B2, D2), dtype=jnp.float32)
    weight2 = jax.random.normal(k_w, (D2, C2), dtype=jnp.float32)
    labels2 = jax.random.randint(k_l, (B2,), 0, C2, dtype=jnp.int32)

    loss2 = amsoftmax_loss(hidden2, labels2, weight2, scale=30.0, margin=0.4,
                           block_b=8, block_c=128)   # grid (3, 2) with padding
    jax.block_until_ready(loss2)
    loss2_ref = amsoftmax_loss_ref(hidden2, labels2, weight2,
                                   scale=30.0, margin=0.4)
    np.testing.assert_allclose(np.asarray(loss2), np.asarray(loss2_ref),
                               rtol=1e-4, atol=1e-4)

    # Test 3: default tile selection with C divisible by 128 (no padded copy
    # of W, mask_tail statically skipped).
    B3, D3, C3 = 16, 64, 256
    k_h, k_w, k_l, key = jax.random.split(key, 4)
    hidden3 = jax.random.normal(k_h, (B3, D3), dtype=jnp.float32)
    weight3 = jax.random.normal(k_w, (D3, C3), dtype=jnp.float32)
    labels3 = jax.random.randint(k_l, (B3,), 0, C3, dtype=jnp.int32)

    loss3 = amsoftmax_loss(hidden3, labels3, weight3, scale=30.0, margin=0.4)
    jax.block_until_ready(loss3)
    loss3_ref = amsoftmax_loss_ref(hidden3, labels3, weight3,
                                   scale=30.0, margin=0.4)
    np.testing.assert_allclose(np.asarray(loss3), np.asarray(loss3_ref),
                               rtol=1e-4, atol=1e-4)

    print("KERNEL_OK")
</pallas_src>

<mosaic_0001>
module attributes {stable_mosaic.version = 11 : i64} {
  func.func @amsoftmax_kernel(%arg0: i32, %arg1: i32, %arg2: memref<8x32xf32, #tpu.memory_space<vmem>>, %arg3: memref<32x128xf32, #tpu.memory_space<vmem>>, %arg4: memref<8x1xi32, #tpu.memory_space<vmem>>, %arg5: memref<8x1xf32, #tpu.memory_space<vmem>>, %arg6: memref<8x1xf32, #tpu.memory_space<vmem>>, %arg7: memref<8x1xf32, #tpu.memory_space<vmem>>, %arg8: memref<8x1xf32, #tpu.memory_space<vmem>>, %arg9: memref<8x1xf32, #tpu.memory_space<vmem>>) attributes {dimension_semantics = [#tpu.dimension_semantics<parallel>, #tpu.dimension_semantics<arbitrary>], iteration_bounds = array<i64: 1, 1>, scalar_prefetch = 0 : i64, scratch_operands = 4 : i64, tpu.core_type = #tpu.core_type<tc>, window_params = [{transform_indices = @transform_0, window_bounds = array<i64: 8, 32>}, {transform_indices = @transform_1, window_bounds = array<i64: 32, 128>}, {transform_indices = @transform_2, window_bounds = array<i64: 8, 1>}, {transform_indices = @transform_3, window_bounds = array<i64: 8, 1>}]} {
    %c0_i32 = arith.constant 0 : i32
    %0 = arith.cmpi eq, %arg1, %c0_i32 : i32
    %1 = arith.extui %0 : i1 to i32
    %c0_i32_0 = arith.constant 0 : i32
    %2 = arith.cmpi ne, %1, %c0_i32_0 : i32
    scf.if %2 {
      %c0_29 = arith.constant 0 : index
      %c0_30 = arith.constant 0 : index
      %51 = vector.load %arg2[%c0_29, %c0_30] : memref<8x32xf32, #tpu.memory_space<vmem>>, vector<8x32xf32>
      %52 = arith.mulf %51, %51 : vector<8x32xf32>
      %cst_31 = arith.constant dense<0.000000e+00> : vector<8xf32>
      %53 = vector.multi_reduction <add>, %52, %cst_31 [1] : vector<8x32xf32> to vector<8xf32>
      %54 = vector.shape_cast %53 : vector<8xf32> to vector<8x1xf32>
      %cst_32 = arith.constant 1.000000e-24 : f32
      %55 = vector.broadcast %cst_32 : f32 to vector<8x1xf32>
      %56 = arith.maximumf %54, %55 : vector<8x1xf32>
      %57 = math.rsqrt %56 : vector<8x1xf32>
      %cst_33 = arith.constant 3.000000e+01 : f32
      %58 = vector.broadcast %cst_33 : f32 to vector<8x1xf32>
      %59 = arith.mulf %58, %57 : vector<8x1xf32>
      %c0_34 = arith.constant 0 : index
      %c0_35 = arith.constant 0 : index
      %60 = vector.load %arg9[%c0_34, %c0_35] : memref<8x1xf32, #tpu.memory_space<vmem>>, vector<8x1xf32>
      tpu.vector_store %arg9[%c0_34, %c0_35], %59 {strides = array<i32>} : memref<8x1xf32, #tpu.memory_space<vmem>>, vector<8x1xf32>,
      %cst_36 = arith.constant -1.000000e+30 : f32
      %61 = vector.broadcast %cst_36 : f32 to vector<8x1xf32>
      %c0_37 = arith.constant 0 : index
      %c0_38 = arith.constant 0 : index
      %62 = vector.load %arg6[%c0_37, %c0_38] : memref<8x1xf32, #tpu.memory_space<vmem>>, vector<8x1xf32>
      tpu.vector_store %arg6[%c0_37, %c0_38], %61 {strides = array<i32>} : memref<8x1xf32, #tpu.memory_space<vmem>>, vector<8x1xf32>,
      %cst_39 = arith.constant 0.000000e+00 : f32
      %63 = vector.broadcast %cst_39 : f32 to vector<8x1xf32>
      %c0_40 = arith.constant 0 : index
      %c0_41 = arith.constant 0 : index
      %64 = vector.load %arg7[%c0_40, %c0_41] : memref<8x1xf32, #tpu.memory_space<vmem>>, vector<8x1xf32>
      tpu.vector_store %arg7[%c0_40, %c0_41], %63 {strides = array<i32>} : memref<8x1xf32, #tpu.memory_space<vmem>>, vector<8x1xf32>,
      %cst_42 = arith.constant 0.000000e+00 : f32
      %65 = vector.broadcast %cst_42 : f32 to vector<8x1xf32>
      %c0_43 = arith.constant 0 : index
      %c0_44 = arith.constant 0 : index
      %66 = vector.load %arg8[%c0_43, %c0_44] : memref<8x1xf32, #tpu.memory_space<vmem>>, vector<8x1xf32>
      tpu.vector_store %arg8[%c0_43, %c0_44], %65 {strides = array<i32>} : memref<8x1xf32, #tpu.memory_space<vmem>>, vector<8x1xf32>,
    } else {
    }
    %c0 = arith.constant 0 : index
    %c0_1 = arith.constant 0 : index
    %3 = vector.load %arg2[%c0, %c0_1] : memref<8x32xf32, #tpu.memory_space<vmem>>, vector<8x32xf32>
    %c0_2 = arith.constant 0 : index
    %c0_3 = arith.constant 0 : index
    %4 = vector.load %arg3[%c0_2, %c0_3] : memref<32x128xf32, #tpu.memory_space<vmem>>, vector<32x128xf32>
    %cst = arith.constant dense<0.000000e+00> : vector<8x128xf32>
    %5 = tpu.matmul %3, %4, %cst {dimension_numbers = #tpu.dot_dimension_numbers<[1], [0], [0], [1], [0, 0, 1, 1], [], []>} : vector<8x32xf32>, vector<32x128xf32>, vector<8x128xf32> -> vector<8x128xf32>
    %c0_4 = arith.constant 0 : index
    %c0_5 = arith.constant 0 : index
    %6 = vector.load %arg9[%c0_4, %c0_5] : memref<8x1xf32, #tpu.memory_space<vmem>>, vector<8x1xf32>
    %7 = vector.broadcast %6 : vector<8x1xf32> to vector<8x128xf32>
    %8 = arith.mulf %5, %7 : vector<8x128xf32>
    %9 = tpu.iota {dimensions = array<i32: 1>} : vector<8x128xi32>
    %c0_6 = arith.constant 0 : index
    %c0_7 = arith.constant 0 : index
    %10 = vector.load %arg4[%c0_6, %c0_7] : memref<8x1xi32, #tpu.memory_space<vmem>>, vector<8x1xi32>
    %c128_i32 = arith.constant 128 : i32
    %11 = arith.muli %arg1, %c128_i32 : i32
    %12 = vector.broadcast %11 : i32 to vector<8x1xi32>
    %13 = arith.subi %10, %12 : vector<8x1xi32>
    %14 = vector.broadcast %13 : vector<8x1xi32> to vector<8x128xi32>
    %15 = arith.cmpi eq, %9, %14 : vector<8x128xi32>
    %cst_8 = arith.constant 1.200000e+01 : f32
    %16 = vector.broadcast %cst_8 : f32 to vector<8x128xf32>
    %17 = arith.subf %8, %16 : vector<8x128xf32>
    %18 = arith.select %15, %17, %8 : vector<8x128xi1>, vector<8x128xf32>
    %c128_i32_9 = arith.constant 128 : i32
    %19 = arith.muli %arg1, %c128_i32_9 : i32
    %c16_i32 = arith.constant 16 : i32
    %20 = arith.subi %c16_i32, %19 : i32
    %21 = vector.broadcast %20 : i32 to vector<8x128xi32>
    %22 = arith.cmpi slt, %9, %21 : vector<8x128xi32>
    %cst_10 = arith.constant -1.000000e+30 : f32
    %23 = vector.broadcast %cst_10 : f32 to vector<8x128xf32>
    %24 = arith.select %22, %18, %23 : vector<8x128xi1>, vector<8x128xf32>
    %c0_11 = arith.constant 0 : index
    %c0_12 = arith.constant 0 : index
    %25 = vector.load %arg6[%c0_11, %c0_12] : memref<8x1xf32, #tpu.memory_space<vmem>>, vector<8x1xf32>
    %cst_13 = arith.constant dense<0xFF800000> : vector<8xf32>
    %26 = vector.multi_reduction <maximumf>, %24, %cst_13 [1] : vector<8x128xf32> to vector<8xf32>
    %27 = vector.shape_cast %26 : vector<8xf32> to vector<8x1xf32>
    %28 = arith.maximumf %25, %27 : vector<8x1xf32>
    %c0_14 = arith.constant 0 : index
    %c0_15 = arith.constant 0 : index
    %29 = vector.load %arg7[%c0_14, %c0_15] : memref<8x1xf32, #tpu.memory_space<vmem>>, vector<8x1xf32>
    %30 = arith.subf %25, %28 : vector<8x1xf32>
    %31 = math.exp %30 : vector<8x1xf32>
    %32 = arith.mulf %29, %31 : vector<8x1xf32>
    %33 = vector.broadcast %28 : vector<8x1xf32> to vector<8x128xf32>
    %34 = arith.subf %24, %33 : vector<8x128xf32>
    %35 = math.exp %34 : vector<8x128xf32>
    %cst_16 = arith.constant dense<0.000000e+00> : vector<8xf32>
    %36 = vector.multi_reduction <add>, %35, %cst_16 [1] : vector<8x128xf32> to vector<8xf32>
    %37 = vector.shape_cast %36 : vector<8xf32> to vector<8x1xf32>
    %38 = arith.addf %32, %37 : vector<8x1xf32>
    %c0_17 = arith.constant 0 : index
    %c0_18 = arith.constant 0 : index
    %39 = vector.load %arg7[%c0_17, %c0_18] : memref<8x1xf32, #tpu.memory_space<vmem>>, vector<8x1xf32>
    tpu.vector_store %arg7[%c0_17, %c0_18], %38 {strides = array<i32>} : memref<8x1xf32, #tpu.memory_space<vmem>>, vector<8x1xf32>,
    %c0_19 = arith.constant 0 : index
    %c0_20 = arith.constant 0 : index
    %40 = vector.load %arg6[%c0_19, %c0_20] : memref<8x1xf32, #tpu.memory_space<vmem>>, vector<8x1xf32>
    tpu.vector_store %arg6[%c0_19, %c0_20], %28 {strides = array<i32>} : memref<8x1xf32, #tpu.memory_space<vmem>>, vector<8x1xf32>,
    %c0_21 = arith.constant 0 : index
    %c0_22 = arith.constant 0 : index
    %41 = vector.load %arg8[%c0_21, %c0_22] : memref<8x1xf32, #tpu.memory_space<vmem>>, vector<8x1xf32>
    %cst_23 = arith.constant 0.000000e+00 : f32
    %42 = vector.broadcast %cst_23 : f32 to vector<8x128xf32>
    %43 = arith.select %15, %24, %42 : vector<8x128xi1>, vector<8x128xf32>
    %cst_24 = arith.constant dense<0.000000e+00> : vector<8xf32>
    %44 = vector.multi_reduction <add>, %43, %cst_24 [1] : vector<8x128xf32> to vector<8xf32>
    %45 = vector.shape_cast %44 : vector<8xf32> to vector<8x1xf32>
    %46 = arith.addf %41, %45 : vector<8x1xf32>
    %c0_25 = arith.constant 0 : index
    %c0_26 = arith.constant 0 : index
    %47 = vector.load %arg8[%c0_25, %c0_26] : memref<8x1xf32, #tpu.memory_space<vmem>>, vector<8x1xf32>
    tpu.vector_store %arg8[%c0_25, %c0_26], %46 {strides = array<i32>} : memref<8x1xf32, #tpu.memory_space<vmem>>, vector<8x1xf32>,
    %c0_i32_27 = arith.constant 0 : i32
    %48 = arith.cmpi eq, %arg1, %c0_i32_27 : i32
    %49 = arith.extui %48 : i1 to i32
    %c0_i32_28 = arith.constant 0 : i32
    %50 = arith.cmpi ne, %49, %c0_i32_28 : i32
    scf.if %50 {
      %c0_29 = arith.constant 0 : index
      %c0_30 = arith.constant 0 : index
      %51 = vector.load %arg6[%c0_29, %c0_30] : memref<8x1xf32, #tpu.memory_space<vmem>>, vector<8x1xf32>
      %c0_31 = arith.constant 0 : index
      %c0_32 = arith.constant 0 : index
      %52 = vector.load %arg7[%c0_31, %c0_32] : memref<8x1xf32, #tpu.memory_space<vmem>>, vector<8x1xf32>
      %53 = math.log %52 : vector<8x1xf32>
      %54 = arith.addf %51, %53 : vector<8x1xf32>
      %c0_33 = arith.constant 0 : index
      %c0_34 = arith.constant 0 : index
      %55 = vector.load %arg8[%c0_33, %c0_34] : memref<8x1xf32, #tpu.memory_space<vmem>>, vector<8x1xf32>
      %56 = arith.subf %54, %55 : vector<8x1xf32>
      %c0_35 = arith.constant 0 : index
      %c0_36 = arith.constant 0 : index
      %57 = vector.load %arg5[%c0_35, %c0_36] : memref<8x1xf32, #tpu.memory_space<vmem>>, vector<8x1xf32>
      tpu.vector_store %arg5[%c0_35, %c0_36], %56 {strides = array<i32>} : memref<8x1xf32, #tpu.memory_space<vmem>>, vector<8x1xf32>,
    } else {
    }
    return
  }
  func.func @transform_0(%arg0: i32, %arg1: i32) -> (i32, i32) {
    %c0_i32 = arith.constant 0 : i32
    %c0_i32_0 = arith.constant 0 : i32
    return %arg0, %c0_i32 : i32, i32
  }
  func.func @transform_1(%arg0: i32, %arg1: i32) -> (i32, i32) {
    %c0_i32 = arith.constant 0 : i32
    %c0_i32_0 = arith.constant 0 : i32
    return %c0_i32, %arg1 : i32, i32
  }
  func.func @transform_2(%arg0: i32, %arg1: i32) -> (i32, i32) {
    %c0_i32 = arith.constant 0 : i32
    %c0_i32_0 = arith.constant 0 : i32
    return %arg0, %c0_i32 : i32, i32
  }
  func.func @transform_3(%arg0: i32, %arg1: i32) -> (i32, i32) {
    %c0_i32 = arith.constant 0 : i32
    %c0_i32_0 = arith.constant 0 : i32
    return %arg0, %c0_i32 : i32, i32
  }
}

</mosaic_0001>

<llo_original>
// kernel: tpu_custom_call.1
$region0: #{tpu_custom_call.1}
  #allocation0 [shape = 'u32[]', space=smem, size = 0x4, offset = 0x4, fixed_abs, tag = 'smem constant byte address 0x4 - core index']
  #allocation1 [shape = 'u32[144,128]{1,0:T(1,128)}', space=vmem, size = 0x12000, scoped, tag = 'internal scratch']
  #allocation2 [shape = 'f32[8,1]{1,0:T(8,128)}', space=vmem, size = 0x1000, scoped, tag = 'scratch operand']
  #allocation3 [shape = 'f32[8,1]{1,0:T(8,128)}', space=vmem, size = 0x1000, scoped, tag = 'scratch operand']
  #allocation4 [shape = 'f32[8,1]{1,0:T(8,128)}', space=vmem, size = 0x1000, scoped, tag = 'scratch operand']
  #allocation5 [shape = 'f32[8,1]{1,0:T(8,128)}', space=vmem, size = 0x1000, scoped, tag = 'scratch operand']
  %s0 = inlined_call_operand.vmem [shape: f32[8,32], index: 0, kind: input, shape index: {}]
  %s1 = inlined_call_operand.hbm [shape: f32[32,128], index: 1, kind: input, shape index: {}]
  %s2 = inlined_call_operand.vmem [shape: s32[8,1], index: 2, kind: input, shape index: {}]
  %s3 = inlined_call_operand.vmem [shape: f32[8,1], index: 3, kind: output, shape index: {}]
  %s4 = sld [smem:[#allocation0]]
  $region34: #{tpu_custom_call.1} parent=0
    _
  %s6 = ssub.s32 1, %s4
  %s7 = scalar_select 0, %s6, %s4
  $region1: #{tpu_custom_call.1} parent=0
    #allocation6 [shape = 'u8[16384]{0}', space=vmem, size = 0x4000, scoped, tag = 'input window, operand 1, single buffered']
    #allocation7 [shape = 's32[1]{0}', space=sflag, size = 0x4, scoped, tag = 'scoped memory for tpu_custom_call.1']
    %8 = vsyncpa [#allocation7], 0
    // Predicated region
    $region2: #{tpu_custom_call.1} parent=1 // pred_check
      _
    $region3: #{tpu_custom_call.1} parent=1 // pred_check_branch
      %10 = sbr.rel (0) target = $region5
    $region4: #{tpu_custom_call.1} parent=1 // pred_region
      _
    $region5: #{tpu_custom_call.1} parent=1 // pred_fallthru
      _
    // Predicated region
    $region6: #{tpu_custom_call.1} parent=1 // pred_check
      _
    $region7: #{tpu_custom_call.1} parent=1 // pred_check_branch
      %12 = sbr.rel (0) target = $region9
    $region8: #{tpu_custom_call.1} parent=1 // pred_region
      %s14 = ssub.s32 512, 512
      %15 = vsyncadd [#allocation7], %s14
      %s16 = sshll.u32 [#allocation6], 4
      %s17 = int_to_ptr.vmem [resolvable:$true] %s16
      %22 = dma.hbm_to_vmem [thread:$0]  %s1, 512, %s17, [#allocation7], 128, 128, 8
    $region9: #{tpu_custom_call.1} parent=1 // pred_fallthru
      _
    // Predicated region
    $region10: #{tpu_custom_call.1} parent=1 // pred_check
      _
    $region11: #{tpu_custom_call.1} parent=1 // pred_check_branch
      %24 = sbr.rel (0) target = $region13
    $region12: #{tpu_custom_call.1} parent=1 // pred_region
      _
    $region13: #{tpu_custom_call.1} parent=1 // pred_fallthru
      _
    // Predicated region
    $region14: #{tpu_custom_call.1} parent=1 // pred_check
      _
    $region15: #{tpu_custom_call.1} parent=1 // pred_check_branch
      %26 = sbr.rel (0) target = $region17
    $region16: #{tpu_custom_call.1} parent=1 // pred_region
      %27 = dma.done [#allocation7], 512
    $region17: #{tpu_custom_call.1} parent=1 // pred_fallthru
      _
    %p28 = scmp.eq.s32.totalorder 0, 0
    // Predicated region
    $region18: #{tpu_custom_call.1} parent=1 // pred_check
      %p29 = pneg %p28
    $region19: #{tpu_custom_call.1} parent=1 // pred_check_branch
      %31 = sbr.rel (%p29) target = $region21
    $region20: #{tpu_custom_call.1} parent=1 // pred_region
      %v32 = vld [vmem:[%s0] sm:$0xff]
      %v33 = vmul.f32 %v32, %v32
      %vm34 = vcmask 261120
      %v35 = vsel %vm34, %v33, 0.0
      %36 = vadd.xlane.f32.xlu0 %v35
      %v37 = vpop.xlane.xlu0 %36
      %v38 = vmax.f32 %v37, 1e-24
      %v39 = vrsqrt.pop %v38
      %v40 = vmul.f32 %v39, 30.0
      %vm41 = vcmask 7168
      %42 = vst.msk [vmem:[#allocation5] sm:$0xff] %vm41, %v40
      %43 = vst.msk [vmem:[#allocation2] sm:$0xff] %vm41, -1e+30
      %44 = vst.msk [vmem:[#allocation3] sm:$0xff] %vm41, 0.0
      %45 = vst.msk [vmem:[#allocation4] sm:$0xff] %vm41, 0.0
    $region21: #{tpu_custom_call.1} parent=1 // pred_fallthru
      _
    %v46 = vld [vmem:[%s0] sm:$0xff]
    %v47 = vld [vmem:[#allocation6] sm:$0xff]
    %v48 = vld [vmem:[#allocation6 + $0x8] sm:$0xff]
    %v49 = vld [vmem:[#allocation6 + $0x10] sm:$0xff]
    %v50 = vld [vmem:[#allocation6 + $0x18] sm:$0xff]
    %vm51 = vcmask 261120
    %v53 = vsel %vm51, %v46, 0
    %55 = vmatprep.subr.mxu0 0.0
    %56 = vmatpush1.msra.mxu0 %v47
    %57 = vmatprep.subr.mxu0 0.0
    %58 = vmatpush1.msra.mxu0 %v48
    %59 = vmatprep.subr.mxu0 0.0
    %60 = vmatpush1.msra.mxu0 %v49
    %61 = vmatprep.subr.mxu0 0.0
    %62 = vmatpush1.msra.mxu0 %v50
    %63 = vmatprep.subr.mxu0 0.0
    %64 = vmatpush1.msra.mxu0 0.0
    %65 = vmatprep.subr.mxu0 0.0
    %66 = vmatpush1.msra.mxu0 0.0
    %67 = vmatprep.subr.mxu0 0.0
    %68 = vmatpush1.msra.mxu0 0.0
    %69 = vmatprep.subr.mxu0 0.0
    %70 = vmatpush1.msra.mxu0 0.0
    %71 = vmatprep.subr.mxu0 0.0
    %72 = vmatpush1.msra.mxu0 0.0
    %73 = vmatprep.subr.mxu0 0.0
    %74 = vmatpush1.msra.mxu0 0.0
    %75 = vmatprep.subr.mxu0 0.0
    %76 = vmatpush1.msra.mxu0 0.0
    %77 = vmatprep.subr.mxu0 0.0
    %78 = vmatpush1.msra.mxu0 0.0
    %79 = vmatprep.subr.mxu0 0.0
    %80 = vmatpush1.msra.mxu0 0.0
    %81 = vmatprep.subr.mxu0 0.0
    %82 = vmatpush1.msra.mxu0 0.0
    %83 = vmatprep.subr.mxu0 0.0
    %84 = vmatpush1.msra.mxu0 0.0
    %85 = vmatprep.subr.mxu0 0.0
    %86 = vmatpush1.msra.mxu0 0.0
    %87 = vmatprep.subr.mxu0 0.0
    %88 = vmatpush1.msra.mxu0 0.0
    %89 = vmatprep.subr.mxu0 0.0
    %90 = vmatpush1.msra.mxu0 0.0
    %91 = vmatprep.subr.mxu0 0.0
    %92 = vmatpush1.msra.mxu0 0.0
    %93 = vmatprep.subr.mxu0 0.0
    %94 = vmatpush1.msra.mxu0 0.0
    %95 = vmatprep.subr.mxu0 0.0
    %96 = vmatpush1.msra.mxu0 0.0
    %97 = vmatprep.subr.mxu0 0.0
    %98 = vmatpush1.msra.mxu0 0.0
    %99 = vmatprep.subr.mxu0 0.0
    %100 = vmatpush1.msra.mxu0 0.0
    %101 = vmatprep.subr.mxu0 0.0
    %102 = vmatpush1.msra.mxu0 0.0
    %103 = vmatprep.subr.mxu0 0.0
    %104 = vmatpush1.msra.mxu0 0.0
    %105 = vmatprep.subr.mxu0 0.0
    %106 = vmatpush1.msra.mxu0 0.0
    %107 = vmatprep.subr.mxu0 0.0
    %108 = vmatpush1.msra.mxu0 0.0
    %109 = vmatprep.subr.mxu0 0.0
    %110 = vmatpush1.msra.mxu0 0.0
    %111 = vmatprep.subr.mxu0 0.0
    %112 = vmatpush1.msra.mxu0 0.0
    %113 = vmatprep.subr.mxu0 0.0
    %114 = vmatpush1.msra.mxu0 0.0
    %115 = vmatprep.subr.mxu0 0.0
    %116 = vmatpush1.msra.mxu0 0.0
    %117 = vmatprep.subr.mxu0 0.0
    %118 = vmatpush1.msra.mxu0 0.0
    %119 = vmatprep.mubr.f32.mxu0 0.0
    %120 = vmatmul.mubr.f32.gmra.mrb[0].mxu0 %v53
    %v121 = vpop.f32.mrb[0].mxu0
    %v122 = vadd.f32 0.0, %v121
    %v123 = vpop.f32.mrb[0].mxu0
    %124 = vdwg.mxu0
    %v125 = vld [vmem:[#allocation5] sm:$0xff]
    %127 = vset.pattern.permute.xlu0 0
    %128 = vperm.xlu0 %127, %v125
    %v129 = vpop.permute.xlu0 %128
    %v131 = vmul.f32 %v122, %v129
    %v132 = vlaneseq
    %v133 = vand.u32 %v132, 127
    %v134 = vld [vmem:[%s2] sm:$0xff]
    %s135 = smul.u32 0, 128
    %v136 = vstv %s135
    %v137 = vsub.s32 %v134, %v136
    %138 = vset.pattern.permute.xlu0 0
    %139 = vperm.xlu0 %138, %v137
    %v140 = vpop.permute.xlu0 %139
    %vm141 = vcmp.eq.s32.totalorder %v133, %v140
    %v142 = vsub.f32 %v131, 12.0
    %v143 = vsel %vm141, %v142, %v131
    %s144 = ssub.s32 16, %s135
    %v145 = vstv %s144
    %vm146 = vcmp.lt.s32.totalorder %v133, %v145
    %v147 = vsel %vm146, %v143, -1e+30
    %v148 = vld [vmem:[#allocation2] sm:$0xff]
    %149 = vmax.xlane.f32.xlu0 %v147
    %v150 = vpop.xlane.xlu0 %149
    %v151 = vmax.f32 %v148, %v150
    %v152 = vld [vmem:[#allocation3] sm:$0xff]
    %v153 = vsub.f32 %v148, %v151
    %v154 = vmul.f32 %v153, 1.442695
    %v155 = vpow.pop %v154
    %v156 = vmul.f32 %v152, %v155
    %158 = vset.pattern.permute.xlu0 0
    %159 = vperm.xlu0 %158, %v151
    %v160 = vpop.permute.xlu0 %159
    %v162 = vsub.f32 %v147, %v160
    %v163 = vmul.f32 %v162, 1.442695
    %v164 = vpow.pop %v163
    %165 = vadd.xlane.f32.xlu0 %v164
    %v166 = vpop.xlane.xlu0 %165
    %v167 = vadd.f32 %v156, %v166
    %vm168 = vcmask 7168
    %169 = vst.msk [vmem:[#allocation3] sm:$0xff] %vm168, %v167
    %170 = vst.msk [vmem:[#allocation2] sm:$0xff] %vm168, %v151
    %v171 = vld [vmem:[#allocation4] sm:$0xff]
    %v172 = vsel %vm141, %v147, 0.0
    %173 = vadd.xlane.f32.xlu0 %v172
    %v174 = vpop.xlane.xlu0 %173
    %v175 = vadd.f32 %v171, %v174
    %176 = vst.msk [vmem:[#allocation4] sm:$0xff] %vm168, %v175
    // Predicated region
    $region22: #{tpu_custom_call.1} parent=1 // pred_check
      %p177 = pneg %p28
    $region23: #{tpu_custom_call.1} parent=1 // pred_check_branch
      %179 = sbr.rel (%p177) target = $region25
    $region24: #{tpu_custom_call.1} parent=1 // pred_region
      %v180 = vld [vmem:[#allocation2] sm:$0xff]
      %v181 = vld [vmem:[#allocation3] sm:$0xff]
      %v182 = vlog2.pop %v181
      %v183 = vmul.f32 %v182, 0.6931472
      %v184 = vadd.f32 %v180, %v183
      %v185 = vld [vmem:[#allocation4] sm:$0xff]
      %v186 = vsub.f32 %v184, %v185
      %187 = vst.msk [vmem:[%s3] sm:$0xff] %vm168, %v186
    $region25: #{tpu_custom_call.1} parent=1 // pred_fallthru
      _
    // Predicated region
    $region26: #{tpu_custom_call.1} parent=1 // pred_check
      _
    $region27: #{tpu_custom_call.1} parent=1 // pred_check_branch
      %189 = sbr.rel (0) target = $region29
    $region28: #{tpu_custom_call.1} parent=1 // pred_region
      _
    $region29: #{tpu_custom_call.1} parent=1 // pred_fallthru
      _
    // Predicated region
    $region30: #{tpu_custom_call.1} parent=1 // pred_check
      _
    $region31: #{tpu_custom_call.1} parent=1 // pred_check_branch
      %191 = sbr.rel (0) target = $region33
    $region32: #{tpu_custom_call.1} parent=1 // pred_region
      _
    $region33: #{tpu_custom_call.1} parent=1 // pred_fallthru
      _
    %192 = vsyncpa [#allocation7], 1

</llo_original>
